<compile_context>
chip_gen: v6e
topology: v6e:2x2x1
jax: 0.10.0
libtpu: 0.0.40
codegen_flags: <defaults>
</compile_context>

<pallas_src>
import jax
import jax.numpy as jnp
from jax.experimental import pallas as pl
from jax.experimental.pallas import tpu as pltpu

M_VIEWS = 10


def _round_up(x, m):
    return -(-x // m) * m


def _view_max_kernel(x_ref, w_ref, b_ref, o_ref):
    # x_ref: (TB, M*C, HW)   bf16 activation stream for TB batch elements
    # w_ref: (M*C, M*Fp)     block-diagonal weight (1/HW folded in), f32, resident
    # b_ref: (1, Fp)         bias (padded), f32, resident
    # o_ref: (TB, Fp)        max-over-views features for this batch block
    #
    # Single full-tile spatial reduction (sum; the mean's 1/HW lives in w_ref).
    feat = jnp.sum(x_ref[...].astype(jnp.float32), axis=-1)               # (TB, M*C)
    # One MXU matmul computes all 10 view projections at once.
    proj = jnp.dot(feat, w_ref[...], preferred_element_type=jnp.float32)  # (TB, M*Fp)
    fp = o_ref.shape[-1]
    acc = proj[:, :fp]
    for m in range(1, M_VIEWS):                    # lane-aligned static slices, pure VPU
        acc = jnp.maximum(acc, proj[:, m * fp:(m + 1) * fp])
    # Shared bias commutes with the view max: add it once at the end.
    o_ref[...] = (acc + b_ref[...]).astype(o_ref.dtype)


def _vmem_budget_bytes():
    """Generation-aware per-step VMEM budget + physical capacity estimate."""
    cap = 64 << 20                                  # conservative fallback (v7x per-TC)
    try:
        info = pltpu.get_tpu_info()
        cap = int(getattr(info, "vmem_capacity_bytes", cap)) or cap
    except Exception:
        pass
    budget = int(cap * 0.4)                         # ~48-51 MiB on v5e/v6e
    if cap <= (64 << 20):                           # v7x: 64 MiB is per-TC, both TCs active
        budget = min(budget, 26 << 20)
    return max(budget, 16 << 20), cap


def _choose_tb(B, per_b_bytes, *, vmem_budget, target_tile=8 << 20):
    """Batch rows per grid step: multiple of 8, fits the budget, ~target bytes,
    and never so large that fewer than 2 useful steps remain."""
    per_b_bytes = max(1, per_b_bytes)
    by_budget = max(8, (vmem_budget // per_b_bytes) // 8 * 8)
    by_target = max(8, (max(1, target_tile // per_b_bytes)) // 8 * 8)
    by_batch = max(8, _round_up(pl.cdiv(B, 2), 8))  # keep >=2 steps meaningful
    return max(8, min(by_budget, by_target, by_batch))


def view_max_aggregate(mvimages, weight, bias, *, act_dtype=jnp.bfloat16):
    """mvimages: (B*M, C, H, W); returns pooled_view.squeeze() -> (B, F)."""
    BM, C, H, W = mvimages.shape
    assert BM % M_VIEWS == 0, "batch must be a multiple of the number of views (10)"
    B = BM // M_VIEWS
    F = weight.shape[1]
    HW = H * W
    MC = M_VIEWS * C
    Fp = _round_up(F, 128)                          # lane-dense output width
    MFp = M_VIEWS * Fp

    # ---- host-side prep ----------------------------------------------------
    # Views/channels onto sublanes, spatial onto lanes; bf16 halves HBM bytes.
    x = mvimages.reshape(B, MC, HW).astype(act_dtype)

    # Fold the spatial mean's 1/HW into the weight and build a block-diagonal
    # (M*C, M*Fp) weight so all 10 view projections become one matmul.
    w_scaled = jnp.pad(weight.astype(jnp.float32) / HW, ((0, 0), (0, Fp - F)))   # (C, Fp)
    eye = jnp.eye(M_VIEWS, dtype=jnp.float32)
    w_bd = (eye[:, None, :, None] * w_scaled[None, :, None, :]).reshape(MC, MFp)
    b_pad = jnp.pad(bias.astype(jnp.float32), (0, Fp - F)).reshape(1, Fp)

    # ---- tiling --------------------------------------------------------------
    itemsize = jnp.dtype(act_dtype).itemsize
    sub = 8 * 4 // itemsize                         # sublane packing (8 f32 / 16 bf16 rows)
    mc_pad = _round_up(MC, sub)
    hw_pad = _round_up(HW, 128)
    stream_b = mc_pad * hw_pad * itemsize           # streamed bytes per batch element
    work_b = MFp * 4 + mc_pad * 4 + 2 * Fp * 4      # matmul result + feat + out dbl-buffer
    per_b = 2 * stream_b + work_b                   # double-buffered input + working set

    budget, cap = _vmem_budget_bytes()
    TB = _choose_tb(B, per_b, vmem_budget=budget)
    steps = max(2, pl.cdiv(B, TB))                  # >=2 steps: pipelining + 2-TC sharding
    B_pad = steps * TB
    if B_pad > B:
        x = jnp.pad(x, ((0, B_pad - B), (0, 0), (0, 0)))

    params_bytes = (MC * MFp + Fp) * 4
    vmem_bytes = TB * per_b + 2 * params_bytes + (4 << 20)
    vmem_bytes = int(min(max(vmem_bytes, 16 << 20), int(cap * 0.9)))

    out = pl.pallas_call(
        _view_max_kernel,
        out_shape=jax.ShapeDtypeStruct((B_pad, Fp), jnp.float32),
        grid_spec=pltpu.PrefetchScalarGridSpec(
            num_scalar_prefetch=0,
            grid=(steps,),
            in_specs=[
                pl.BlockSpec((TB, MC, HW), lambda g: (g, 0, 0)),
                pl.BlockSpec((MC, MFp), lambda g: (0, 0)),
                pl.BlockSpec((1, Fp), lambda g: (0, 0)),
            ],
            out_specs=pl.BlockSpec((TB, Fp), lambda g: (g, 0)),
        ),
        compiler_params=pltpu.CompilerParams(
            dimension_semantics=("parallel",),
            vmem_limit_bytes=vmem_bytes,
        ),
    )(x, w_bd, b_pad)

    # Drop batch/lane padding, then mirror torch `.squeeze()` (all size-1 dims).
    return jnp.squeeze(out[:B, :F])


def _reference(mvimages, weight, bias):
    BM, C, H, W = mvimages.shape
    B = BM // M_VIEWS
    feat = mvimages.reshape(BM, C, H * W).astype(jnp.float32).mean(axis=-1)   # (BM, C)
    proj = feat @ weight + bias                                               # (BM, F)
    return jnp.max(proj.reshape(B, M_VIEWS, -1), axis=1).squeeze()


if __name__ == "__main__":
    key = jax.random.PRNGKey(0)
    kx, kw, kb = jax.random.split(key, 3)

    B, C, H, W, F = 2, 4, 16, 16, 32
    mvimages = jax.random.normal(kx, (B * M_VIEWS, C, H, W), dtype=jnp.float32)
    # Deterministic synthetic backbone parameters (C -> F linear head).
    weight = jax.random.normal(kw, (C, F), dtype=jnp.float32) * 0.1
    bias = jax.random.normal(kb, (F,), dtype=jnp.float32) * 0.01

    out = jax.block_until_ready(view_max_aggregate(mvimages, weight, bias))

    # Tight check vs. a reference fed the same bf16-quantized activations,
    # plus a looser check vs. the original float32 path.
    ref_q = _reference(mvimages.astype(jnp.bfloat16).astype(jnp.float32), weight, bias)
    ref_f32 = _reference(mvimages, weight, bias)
    ref_q = jax.block_until_ready(ref_q)

    assert out.shape == (B, F), out.shape
    assert jnp.allclose(out, ref_q, atol=1e-3, rtol=1e-3), "mismatch vs bf16 reference"
    assert jnp.allclose(out, ref_f32, atol=1e-2, rtol=1e-2), "mismatch vs f32 reference"
    print("KERNEL_OK")
</pallas_src>

<mosaic_0001>
module attributes {stable_mosaic.version = 11 : i64} {
  func.func @_view_max_kernel(%arg0: i32, %arg1: memref<8x40x256xbf16, #tpu.memory_space<vmem>>, %arg2: memref<40x1280xf32, #tpu.memory_space<vmem>>, %arg3: memref<1x128xf32, #tpu.memory_space<vmem>>, %arg4: memref<8x128xf32, #tpu.memory_space<vmem>>) attributes {dimension_semantics = [#tpu.dimension_semantics<parallel>], iteration_bounds = array<i64: 2>, scalar_prefetch = 0 : i64, scratch_operands = 0 : i64, tpu.core_type = #tpu.core_type<tc>, window_params = [{transform_indices = @transform_0, window_bounds = array<i64: 8, 40, 256>}, {pipeline_mode = #tpu.pipeline_mode<synchronous>, transform_indices = @transform_1, window_bounds = array<i64: 40, 1280>}, {pipeline_mode = #tpu.pipeline_mode<synchronous>, transform_indices = @transform_2, window_bounds = array<i64: 1, 128>}, {transform_indices = @transform_3, window_bounds = array<i64: 8, 128>}]} {
    %c0 = arith.constant 0 : index
    %c0_0 = arith.constant 0 : index
    %c0_1 = arith.constant 0 : index
    %0 = vector.load %arg1[%c0, %c0_0, %c0_1] : memref<8x40x256xbf16, #tpu.memory_space<vmem>>, vector<8x40x256xbf16>
    %1 = arith.extf %0 : vector<8x40x256xbf16> to vector<8x40x256xf32>
    %cst = arith.constant dense<0.000000e+00> : vector<8x40xf32>
    %2 = vector.multi_reduction <add>, %1, %cst [2] : vector<8x40x256xf32> to vector<8x40xf32>
    %c0_2 = arith.constant 0 : index
    %c0_3 = arith.constant 0 : index
    %3 = vector.load %arg2[%c0_2, %c0_3] : memref<40x1280xf32, #tpu.memory_space<vmem>>, vector<40x1280xf32>
    %cst_4 = arith.constant dense<0.000000e+00> : vector<8x1280xf32>
    %4 = tpu.matmul %2, %3, %cst_4 {dimension_numbers = #tpu.dot_dimension_numbers<[1], [0], [0], [1], [0, 0, 1, 1], [], []>} : vector<8x40xf32>, vector<40x1280xf32>, vector<8x1280xf32> -> vector<8x1280xf32>
    %5 = vector.extract_strided_slice %4 {offsets = [0, 0], sizes = [8, 128], strides = [1, 1]} : vector<8x1280xf32> to vector<8x128xf32>
    %6 = vector.extract_strided_slice %4 {offsets = [0, 128], sizes = [8, 128], strides = [1, 1]} : vector<8x1280xf32> to vector<8x128xf32>
    %7 = arith.maximumf %5, %6 : vector<8x128xf32>
    %8 = vector.extract_strided_slice %4 {offsets = [0, 256], sizes = [8, 128], strides = [1, 1]} : vector<8x1280xf32> to vector<8x128xf32>
    %9 = arith.maximumf %7, %8 : vector<8x128xf32>
    %10 = vector.extract_strided_slice %4 {offsets = [0, 384], sizes = [8, 128], strides = [1, 1]} : vector<8x1280xf32> to vector<8x128xf32>
    %11 = arith.maximumf %9, %10 : vector<8x128xf32>
    %12 = vector.extract_strided_slice %4 {offsets = [0, 512], sizes = [8, 128], strides = [1, 1]} : vector<8x1280xf32> to vector<8x128xf32>
    %13 = arith.maximumf %11, %12 : vector<8x128xf32>
    %14 = vector.extract_strided_slice %4 {offsets = [0, 640], sizes = [8, 128], strides = [1, 1]} : vector<8x1280xf32> to vector<8x128xf32>
    %15 = arith.maximumf %13, %14 : vector<8x128xf32>
    %16 = vector.extract_strided_slice %4 {offsets = [0, 768], sizes = [8, 128], strides = [1, 1]} : vector<8x1280xf32> to vector<8x128xf32>
    %17 = arith.maximumf %15, %16 : vector<8x128xf32>
    %18 = vector.extract_strided_slice %4 {offsets = [0, 896], sizes = [8, 128], strides = [1, 1]} : vector<8x1280xf32> to vector<8x128xf32>
    %19 = arith.maximumf %17, %18 : vector<8x128xf32>
    %20 = vector.extract_strided_slice %4 {offsets = [0, 1024], sizes = [8, 128], strides = [1, 1]} : vector<8x1280xf32> to vector<8x128xf32>
    %21 = arith.maximumf %19, %20 : vector<8x128xf32>
    %22 = vector.extract_strided_slice %4 {offsets = [0, 1152], sizes = [8, 128], strides = [1, 1]} : vector<8x1280xf32> to vector<8x128xf32>
    %23 = arith.maximumf %21, %22 : vector<8x128xf32>
    %c0_5 = arith.constant 0 : index
    %c0_6 = arith.constant 0 : index
    %24 = vector.load %arg3[%c0_5, %c0_6] : memref<1x128xf32, #tpu.memory_space<vmem>>, vector<1x128xf32>
    %25 = vector.broadcast %24 : vector<1x128xf32> to vector<8x128xf32>
    %26 = arith.addf %23, %25 : vector<8x128xf32>
    %c0_7 = arith.constant 0 : index
    %c0_8 = arith.constant 0 : index
    %27 = vector.load %arg4[%c0_7, %c0_8] : memref<8x128xf32, #tpu.memory_space<vmem>>, vector<8x128xf32>
    tpu.vector_store %arg4[%c0_7, %c0_8], %26 {strides = array<i32>} : memref<8x128xf32, #tpu.memory_space<vmem>>, vector<8x128xf32>,
    return
  }
  func.func @transform_0(%arg0: i32) -> (i32, i32, i32) {
    %c0_i32 = arith.constant 0 : i32
    %c0_i32_0 = arith.constant 0 : i32
    %c0_i32_1 = arith.constant 0 : i32
    return %arg0, %c0_i32, %c0_i32_0 : i32, i32, i32
  }
  func.func @transform_1(%arg0: i32) -> (i32, i32) {
    %c0_i32 = arith.constant 0 : i32
    %c0_i32_0 = arith.constant 0 : i32
    %c0_i32_1 = arith.constant 0 : i32
    return %c0_i32, %c0_i32_0 : i32, i32
  }
  func.func @transform_2(%arg0: i32) -> (i32, i32) {
    %c0_i32 = arith.constant 0 : i32
    %c0_i32_0 = arith.constant 0 : i32
    %c0_i32_1 = arith.constant 0 : i32
    return %c0_i32, %c0_i32_0 : i32, i32
  }
  func.func @transform_3(%arg0: i32) -> (i32, i32) {
    %c0_i32 = arith.constant 0 : i32
    %c0_i32_0 = arith.constant 0 : i32
    return %arg0, %c0_i32 : i32, i32
  }
}

</mosaic_0001>

<llo_original>
// kernel: tpu_custom_call.1
$region0: #{tpu_custom_call.1}
  #allocation0 [shape = 'u32[]', space=smem, size = 0x4, offset = 0x4, fixed_abs, tag = 'smem constant byte address 0x4 - core index']
  #allocation1 [shape = 'u32[144,128]{1,0:T(1,128)}', space=vmem, size = 0x12000, scoped, tag = 'internal scratch']
  %s0 = inlined_call_operand.hbm [shape: bf16[16,40,256], index: 0, kind: input, shape index: {}]
  %s1 = inlined_call_operand.hbm [shape: f32[40,1280], index: 1, kind: input, shape index: {}]
  %s2 = inlined_call_operand.vmem [shape: f32[1,128], index: 2, kind: input, shape index: {}]
  %s3 = inlined_call_operand.hbm [shape: f32[16,128], index: 3, kind: output, shape index: {}]
  %s4 = sld [smem:[#allocation0]]
  $region53: #{tpu_custom_call.1} parent=0
    _
  %s6 = ssub.s32 1, %s4
  %s7 = scalar_select 0, %s6, %s4
  $region1: #{tpu_custom_call.1} parent=0
    #allocation2 [shape = 'u8[327680]{0}', space=vmem, size = 0x50000, scoped, tag = 'input window, operand 0']
    #allocation3 [shape = 's32[2]{0}', space=sflag, size = 0x8, scoped, tag = 'scoped memory for tpu_custom_call.1']
    #allocation4 [shape = 's32[2]{0}', space=sflag, size = 0x8, scoped, tag = 'scoped memory for tpu_custom_call.1']
    #allocation5 [shape = 'u8[204800]{0}', space=vmem, size = 0x32000, scoped, tag = 'input window, operand 1, single buffered']
    #allocation6 [shape = 's32[1]{0}', space=sflag, size = 0x4, scoped, tag = 'scoped memory for tpu_custom_call.1']
    #allocation7 [shape = 'u8[8192]{0}', space=vmem, size = 0x2000, scoped, tag = 'output window, operand 0']
    %8 = vsyncpa [#allocation3], 0
    %s9 = scalar_lea.sflag [#allocation3], 1
    %10 = vsyncpa %s9, 0
    %11 = vsyncpa [#allocation6], 0
    %12 = vsyncpa [#allocation4], 0
    %s13 = scalar_lea.sflag [#allocation4], 1
    %14 = vsyncpa %s13, 0
    loop: start=0, step=1, limit=4
    $region2: #{tpu_custom_call.1} parent=1 // loop_pre_header
      _
    $region3: #{tpu_custom_call.1} parent=1 // loop_header
      %s16 = sphi 0, %s20
      %p17 = scmp.ge.s32.totalorder %s16, 4
      %s26 = sphi 0, %s28
      %s29 = sphi 0, %s26
      %s30 = sphi 0, %s29
      %s46 = sphi 0, %s30
      %s50 = sphi 0, %s50
      %s52 = sphi 0, %s50
      %s53 = sphi 0, %s52
      %s67 = sphi 0, %s53
      %s71 = sphi 0, %s71
      %s73 = sphi 0, %s71
      %s74 = sphi 0, %s73
      %s88 = sphi 0, %s74
      %s94 = sphi 0, %s96
      %s97 = sphi 0, %s94
      %s98 = sphi 0, %s97
      %s114 = sphi 0, %s98
    $region4: #{tpu_custom_call.1} parent=1 // loop_header_branch
      %19 = sbr.rel (%p17) target = $region8
    $region5: #{tpu_custom_call.1} parent=1 // loop_body
      %s21 = ssub.s32 %s16, 1
      %s22 = ssub.s32 %s16, 2
      %s23 = sadd.s32 %s16, 1
      %s24 = ssub.s32 %s16, %s23
      %p25 = scmp.eq.s32.totalorder %s24, 0
      %s27 = sadd.s32 %s26, 1
      %s28 = scalar_select %p25, %s26, %s27
      %p31 = pneg %p25
      %p32 = scmp.eq.s32.totalorder %s16, 1
      %p33 = por %p31, %p32
      %p34 = scmp.ne.s32.totalorder %s26, %s29
      %p35 = scmp.eq.s32.totalorder %s16, 0
      %p36 = por %p34, %p35
      %p37 = scmp.ne.s32.totalorder %s26, %s29
      %p38 = scmp.eq.s32.totalorder %s21, 1
      %p39 = por %p37, %p38
      %p40 = scmp.ne.s32.totalorder %s29, %s30
      %p41 = scmp.eq.s32.totalorder %s21, 0
      %p42 = por %p40, %p41
      %p43 = scmp.ne.s32.totalorder %s29, %s30
      %p44 = scmp.eq.s32.totalorder %s22, 1
      %p45 = por %p43, %p44
      %p47 = scmp.ne.s32.totalorder %s30, %s46
      %p48 = scmp.eq.s32.totalorder %s22, 0
      %p49 = por %p47, %p48
      %s51 = sadd.s32 %s50, 1
      %p54 = scmp.eq.s32.totalorder %s16, 1
      %p55 = scmp.ne.s32.totalorder %s50, %s52
      %p56 = scmp.eq.s32.totalorder %s16, 0
      %p57 = por %p55, %p56
      %p58 = scmp.ne.s32.totalorder %s50, %s52
      %p59 = scmp.eq.s32.totalorder %s21, 1
      %p60 = por %p58, %p59
      %p61 = scmp.ne.s32.totalorder %s52, %s53
      %p62 = scmp.eq.s32.totalorder %s21, 0
      %p63 = por %p61, %p62
      %p64 = scmp.ne.s32.totalorder %s52, %s53
      %p65 = scmp.eq.s32.totalorder %s22, 1
      %p66 = por %p64, %p65
      %p68 = scmp.ne.s32.totalorder %s53, %s67
      %p69 = scmp.eq.s32.totalorder %s22, 0
      %p70 = por %p68, %p69
      %s72 = sadd.s32 %s71, 1
      %p75 = scmp.eq.s32.totalorder %s16, 1
      %p76 = scmp.ne.s32.totalorder %s71, %s73
      %p77 = scmp.eq.s32.totalorder %s16, 0
      %p78 = por %p76, %p77
      %p79 = scmp.ne.s32.totalorder %s71, %s73
      %p80 = scmp.eq.s32.totalorder %s21, 1
      %p81 = por %p79, %p80
      %p82 = scmp.ne.s32.totalorder %s73, %s74
      %p83 = scmp.eq.s32.totalorder %s21, 0
      %p84 = por %p82, %p83
      %p85 = scmp.ne.s32.totalorder %s73, %s74
      %p86 = scmp.eq.s32.totalorder %s22, 1
      %p87 = por %p85, %p86
      %p89 = scmp.ne.s32.totalorder %s74, %s88
      %p90 = scmp.eq.s32.totalorder %s22, 0
      %p91 = por %p89, %p90
      %s92 = ssub.s32 %s16, %s23
      %p93 = scmp.eq.s32.totalorder %s92, 0
      %s95 = sadd.s32 %s94, 1
      %s96 = scalar_select %p93, %s94, %s95
      %p99 = pneg %p93
      %p100 = scmp.eq.s32.totalorder %s16, 1
      %p101 = por %p99, %p100
      %p102 = scmp.ne.s32.totalorder %s94, %s97
      %p103 = scmp.eq.s32.totalorder %s16, 0
      %p104 = por %p102, %p103
      %p105 = scmp.ne.s32.totalorder %s94, %s97
      %p106 = scmp.eq.s32.totalorder %s21, 1
      %p107 = por %p105, %p106
      %p108 = scmp.ne.s32.totalorder %s97, %s98
      %p109 = scmp.eq.s32.totalorder %s21, 0
      %p110 = por %p108, %p109
      %p111 = scmp.ne.s32.totalorder %s97, %s98
      %p112 = scmp.eq.s32.totalorder %s22, 1
      %p113 = por %p111, %p112
      %p115 = scmp.ne.s32.totalorder %s98, %s114
      %p116 = scmp.eq.s32.totalorder %s22, 0
      %p117 = por %p115, %p116
      %p118 = scmp.le.s32.totalorder 1, %s16
      %p119 = scmp.lt.s32.totalorder %s16, 3
      %p120 = pnand %p118, %p119
      %p121 = pneg %p120
      // Predicated region
      $region9: #{tpu_custom_call.1} parent=5 // pred_check
        _
      $region10: #{tpu_custom_call.1} parent=5 // pred_check_branch
        %123 = sbr.rel (%p120) target = $region12
      $region11: #{tpu_custom_call.1} parent=5 // pred_region
        %s124 = ssub.s32 %s16, 1
        // Predicated region
        $region13: #{tpu_custom_call.1} parent=11 // pred_check
          %p125 = pneg %p63
        $region14: #{tpu_custom_call.1} parent=11 // pred_check_branch
          %127 = sbr.rel (%p125) target = $region16
        $region15: #{tpu_custom_call.1} parent=11 // pred_region
          %s129 = ssub.s32 6400, 6400
          %130 = vsyncadd [#allocation6], %s129
          %s131 = sshll.u32 [#allocation5], 4
          %s132 = int_to_ptr.vmem [resolvable:$true] %s131
          %137 = dma.hbm_to_vmem [thread:$0]  %s1, 6400, %s132, [#allocation6], 1280, 1280, 80
        $region16: #{tpu_custom_call.1} parent=11 // pred_fallthru
          _
        // Predicated region
        $region17: #{tpu_custom_call.1} parent=11 // pred_check
          %p138 = pneg %p84
        $region18: #{tpu_custom_call.1} parent=11 // pred_check_branch
          %140 = sbr.rel (%p138) target = $region20
        $region19: #{tpu_custom_call.1} parent=11 // pred_region
          _
        $region20: #{tpu_custom_call.1} parent=11 // pred_fallthru
          _
      $region12: #{tpu_custom_call.1} parent=5 // pred_fallthru
        _
      %p141 = scmp.lt.s32.totalorder %s16, 2
      // Predicated region
      $region21: #{tpu_custom_call.1} parent=5 // pred_check
        %p142 = pneg %p141
      $region22: #{tpu_custom_call.1} parent=5 // pred_check_branch
        %144 = sbr.rel (%p142) target = $region24
      $region23: #{tpu_custom_call.1} parent=5 // pred_region
        // Predicated region
        $region25: #{tpu_custom_call.1} parent=23 // pred_check
          %p145 = pneg %p36
        $region26: #{tpu_custom_call.1} parent=23 // pred_check_branch
          %147 = sbr.rel (%p145) target = $region28
        $region27: #{tpu_custom_call.1} parent=23 // pred_region
          %s148 = sand.u32 %s26, 1
          %s149 = scalar_lea.sflag [#allocation3], %s148
          %s150 = sand.u32 %s26, 1
          %s151 = smul.addr %s150, 320
          %s152 = scalar_lea.vmem [#allocation2], %s151
          %s153 = smul.u32 8, %s16
          %s155 = ssub.s32 5120, 5120
          %156 = vsyncadd %s149, %s155
          %s157 = smul.addr %s153, 10
          %s158 = smul.addr %s157, 64
          %s159 = scalar_lea.hbm %s0, %s158
          %s160 = sshll.u32 %s152, 4
          %s161 = int_to_ptr.vmem [resolvable:$true] %s160
          %166 = dma.hbm_to_vmem [thread:$0]  %s159, 5120, %s161, %s149, 128, 128, 8
        $region28: #{tpu_custom_call.1} parent=23 // pred_fallthru
          _
      $region24: #{tpu_custom_call.1} parent=5 // pred_fallthru
        _
      %p167 = scmp.le.s32.totalorder 1, %s16
      %p168 = scmp.lt.s32.totalorder %s16, 3
      %p169 = pnand %p167, %p168
      %p170 = pneg %p169
      // Predicated region
      $region29: #{tpu_custom_call.1} parent=5 // pred_check
        _
      $region30: #{tpu_custom_call.1} parent=5 // pred_check_branch
        %172 = sbr.rel (%p169) target = $region32
      $region31: #{tpu_custom_call.1} parent=5 // pred_region
        %s173 = ssub.s32 %s16, 1
        %s174 = sand.u32 %s29, 1
        %s175 = scalar_lea.sflag [#allocation3], %s174
        %s176 = sand.u32 %s29, 1
        %s177 = smul.addr %s176, 320
        %s178 = scalar_lea.vmem [#allocation2], %s177
        // Predicated region
        $region33: #{tpu_custom_call.1} parent=31 // pred_check
          %p179 = pneg %p42
        $region34: #{tpu_custom_call.1} parent=31 // pred_check_branch
          %181 = sbr.rel (%p179) target = $region36
        $region35: #{tpu_custom_call.1} parent=31 // pred_region
          %182 = dma.done %s175, 5120
        $region36: #{tpu_custom_call.1} parent=31 // pred_fallthru
          _
        // Predicated region
        $region37: #{tpu_custom_call.1} parent=31 // pred_check
          %p183 = pneg %p63
        $region38: #{tpu_custom_call.1} parent=31 // pred_check_branch
          %185 = sbr.rel (%p183) target = $region40
        $region39: #{tpu_custom_call.1} parent=31 // pred_region
          %186 = dma.done [#allocation6], 6400
        $region40: #{tpu_custom_call.1} parent=31 // pred_fallthru
          _
        %s187 = sand.u32 %s29, 1
        %s188 = scalar_lea.sflag [#allocation3], %s187
        %s189 = sand.u32 %s29, 1
        %s190 = smul.addr %s189, 320
        %s191 = scalar_lea.vmem [#allocation2], %s190
        %p192 = pneg %p42
        %p193 = pneg %p39
        %p194 = pneg %p63
        %p195 = pneg %p60
        %p196 = pneg %p84
        %p197 = pneg %p81
        %p198 = pneg %p110
        %p199 = pneg %p107
        %s200 = sand.u32 %s97, 1
        %s201 = scalar_lea.sflag [#allocation4], %s200
        %s202 = sand.u32 %s97, 1
        %s203 = smul.addr %s202, 8
        %s204 = scalar_lea.vmem [#allocation7], %s203
        %s205 = smul.u32 8, %s21
        %v206 = vld [vmem:[%s178] sm:$0xff]
        %v207 = vld [vmem:[%s178 + $0x8] sm:$0xff]
        %v208 = vld [vmem:[%s178 + $0x10] sm:$0xff]
        %v209 = vld [vmem:[%s178 + $0x18] sm:$0xff]
        %v210 = vld [vmem:[%s178 + $0x20] sm:$0xff]
        %v211 = vld [vmem:[%s178 + $0x28] sm:$0xff]
        %v212 = vld [vmem:[%s178 + $0x30] sm:$0xff]
        %v213 = vld [vmem:[%s178 + $0x38] sm:$0xff]
        %v214 = vld [vmem:[%s178 + $0x40] sm:$0xff]
        %v215 = vld [vmem:[%s178 + $0x48] sm:$0xff]
        %v216 = vld [vmem:[%s178 + $0x50] sm:$0xff]
        %v217 = vld [vmem:[%s178 + $0x58] sm:$0xff]
        %v218 = vld [vmem:[%s178 + $0x60] sm:$0xff]
        %v219 = vld [vmem:[%s178 + $0x68] sm:$0xff]
        %v220 = vld [vmem:[%s178 + $0x70] sm:$0xff]
        %v221 = vld [vmem:[%s178 + $0x78] sm:$0xff]
        %v222 = vld [vmem:[%s178 + $0x80] sm:$0xff]
        %v223 = vld [vmem:[%s178 + $0x88] sm:$0xff]
        %v224 = vld [vmem:[%s178 + $0x90] sm:$0xff]
        %v225 = vld [vmem:[%s178 + $0x98] sm:$0xff]
        %v226 = vld [vmem:[%s178 + $0xa0] sm:$0xff]
        %v227 = vld [vmem:[%s178 + $0xa8] sm:$0xff]
        %v228 = vld [vmem:[%s178 + $0xb0] sm:$0xff]
        %v229 = vld [vmem:[%s178 + $0xb8] sm:$0xff]
        %v230 = vld [vmem:[%s178 + $0xc0] sm:$0xff]
        %v231 = vld [vmem:[%s178 + $0xc8] sm:$0xff]
        %v232 = vld [vmem:[%s178 + $0xd0] sm:$0xff]
        %v233 = vld [vmem:[%s178 + $0xd8] sm:$0xff]
        %v234 = vld [vmem:[%s178 + $0xe0] sm:$0xff]
        %v235 = vld [vmem:[%s178 + $0xe8] sm:$0xff]
        %v236 = vld [vmem:[%s178 + $0xf0] sm:$0xff]
        %v237 = vld [vmem:[%s178 + $0xf8] sm:$0xff]
        %v238 = vld [vmem:[%s178 + $0x100] sm:$0xff]
        %v239 = vld [vmem:[%s178 + $0x108] sm:$0xff]
        %v240 = vld [vmem:[%s178 + $0x110] sm:$0xff]
        %v241 = vld [vmem:[%s178 + $0x118] sm:$0xff]
        %v242 = vld [vmem:[%s178 + $0x120] sm:$0xff]
        %v243 = vld [vmem:[%s178 + $0x128] sm:$0xff]
        %v244 = vld [vmem:[%s178 + $0x130] sm:$0xff]
        %v245 = vld [vmem:[%s178 + $0x138] sm:$0xff]
        %v246 = vunpack.c.l.bf16 %v206
        %v247 = vunpack.c.h.bf16 %v206
        %v248 = vunpack.c.l.bf16 %v207
        %v249 = vunpack.c.h.bf16 %v207
        %v250 = vunpack.c.l.bf16 %v208
        %v251 = vunpack.c.h.bf16 %v208
        %v252 = vunpack.c.l.bf16 %v209
        %v253 = vunpack.c.h.bf16 %v209
        %v254 = vunpack.c.l.bf16 %v210
        %v255 = vunpack.c.h.bf16 %v210
        %v256 = vunpack.c.l.bf16 %v211
        %v257 = vunpack.c.h.bf16 %v211
        %v258 = vunpack.c.l.bf16 %v212
        %v259 = vunpack.c.h.bf16 %v212
        %v260 = vunpack.c.l.bf16 %v213
        %v261 = vunpack.c.h.bf16 %v213
        %v262 = vunpack.c.l.bf16 %v214
        %v263 = vunpack.c.h.bf16 %v214
        %v264 = vunpack.c.l.bf16 %v215
        %v265 = vunpack.c.h.bf16 %v215
        %v266 = vunpack.c.l.bf16 %v216
        %v267 = vunpack.c.h.bf16 %v216
        %v268 = vunpack.c.l.bf16 %v217
        %v269 = vunpack.c.h.bf16 %v217
        %v270 = vunpack.c.l.bf16 %v218
        %v271 = vunpack.c.h.bf16 %v218
        %v272 = vunpack.c.l.bf16 %v219
        %v273 = vunpack.c.h.bf16 %v219
        %v274 = vunpack.c.l.bf16 %v220
        %v275 = vunpack.c.h.bf16 %v220
        %v276 = vunpack.c.l.bf16 %v221
        %v277 = vunpack.c.h.bf16 %v221
        %v278 = vunpack.c.l.bf16 %v222
        %v279 = vunpack.c.h.bf16 %v222
        %v280 = vunpack.c.l.bf16 %v223
        %v281 = vunpack.c.h.bf16 %v223
        %v282 = vunpack.c.l.bf16 %v224
        %v283 = vunpack.c.h.bf16 %v224
        %v284 = vunpack.c.l.bf16 %v225
        %v285 = vunpack.c.h.bf16 %v225
        %v286 = vunpack.c.l.bf16 %v226
        %v287 = vunpack.c.h.bf16 %v226
        %v288 = vunpack.c.l.bf16 %v227
        %v289 = vunpack.c.h.bf16 %v227
        %v290 = vunpack.c.l.bf16 %v228
        %v291 = vunpack.c.h.bf16 %v228
        %v292 = vunpack.c.l.bf16 %v229
        %v293 = vunpack.c.h.bf16 %v229
        %v294 = vunpack.c.l.bf16 %v230
        %v295 = vunpack.c.h.bf16 %v230
        %v296 = vunpack.c.l.bf16 %v231
        %v297 = vunpack.c.h.bf16 %v231
        %v298 = vunpack.c.l.bf16 %v232
        %v299 = vunpack.c.h.bf16 %v232
        %v300 = vunpack.c.l.bf16 %v233
        %v301 = vunpack.c.h.bf16 %v233
        %v302 = vunpack.c.l.bf16 %v234
        %v303 = vunpack.c.h.bf16 %v234
        %v304 = vunpack.c.l.bf16 %v235
        %v305 = vunpack.c.h.bf16 %v235
        %v306 = vunpack.c.l.bf16 %v236
        %v307 = vunpack.c.h.bf16 %v236
        %v308 = vunpack.c.l.bf16 %v237
        %v309 = vunpack.c.h.bf16 %v237
        %v310 = vunpack.c.l.bf16 %v238
        %v311 = vunpack.c.h.bf16 %v238
        %v312 = vunpack.c.l.bf16 %v239
        %v313 = vunpack.c.h.bf16 %v239
        %v314 = vunpack.c.l.bf16 %v240
        %v315 = vunpack.c.h.bf16 %v240
        %v316 = vunpack.c.l.bf16 %v241
        %v317 = vunpack.c.h.bf16 %v241
        %v318 = vunpack.c.l.bf16 %v242
        %v319 = vunpack.c.h.bf16 %v242
        %v320 = vunpack.c.l.bf16 %v243
        %v321 = vunpack.c.h.bf16 %v243
        %v322 = vunpack.c.l.bf16 %v244
        %v323 = vunpack.c.h.bf16 %v244
        %v324 = vunpack.c.l.bf16 %v245
        %v325 = vunpack.c.h.bf16 %v245
        %v326 = vadd.f32 %v246, %v247
        %327 = vadd.xlane.f32.xlu0 %v326
        %v328 = vpop.xlane.xlu0 %327
        %v329 = vadd.f32 %v248, %v249
        %330 = vadd.xlane.f32.xlu0 %v329
        %v331 = vpop.xlane.xlu0 %330
        %v332 = vadd.f32 %v250, %v251
        %333 = vadd.xlane.f32.xlu0 %v332
        %v334 = vpop.xlane.xlu0 %333
        %v335 = vadd.f32 %v252, %v253
        %336 = vadd.xlane.f32.xlu0 %v335
        %v337 = vpop.xlane.xlu0 %336
        %v338 = vadd.f32 %v254, %v255
        %339 = vadd.xlane.f32.xlu0 %v338
        %v340 = vpop.xlane.xlu0 %339
        %v341 = vadd.f32 %v256, %v257
        %342 = vadd.xlane.f32.xlu0 %v341
        %v343 = vpop.xlane.xlu0 %342
        %v344 = vadd.f32 %v258, %v259
        %345 = vadd.xlane.f32.xlu0 %v344
        %v346 = vpop.xlane.xlu0 %345
        %v347 = vadd.f32 %v260, %v261
        %348 = vadd.xlane.f32.xlu0 %v347
        %v349 = vpop.xlane.xlu0 %348
        %v350 = vadd.f32 %v262, %v263
        %351 = vadd.xlane.f32.xlu0 %v350
        %v352 = vpop.xlane.xlu0 %351
        %v353 = vadd.f32 %v264, %v265
        %354 = vadd.xlane.f32.xlu0 %v353
        %v355 = vpop.xlane.xlu0 %354
        %v356 = vadd.f32 %v266, %v267
        %357 = vadd.xlane.f32.xlu0 %v356
        %v358 = vpop.xlane.xlu0 %357
        %v359 = vadd.f32 %v268, %v269
        %360 = vadd.xlane.f32.xlu0 %v359
        %v361 = vpop.xlane.xlu0 %360
        %v362 = vadd.f32 %v270, %v271
        %363 = vadd.xlane.f32.xlu0 %v362
        %v364 = vpop.xlane.xlu0 %363
        %v365 = vadd.f32 %v272, %v273
        %366 = vadd.xlane.f32.xlu0 %v365
        %v367 = vpop.xlane.xlu0 %366
        %v368 = vadd.f32 %v274, %v275
        %369 = vadd.xlane.f32.xlu0 %v368
        %v370 = vpop.xlane.xlu0 %369
        %v371 = vadd.f32 %v276, %v277
        %372 = vadd.xlane.f32.xlu0 %v371
        %v373 = vpop.xlane.xlu0 %372
        %v374 = vadd.f32 %v278, %v279
        %375 = vadd.xlane.f32.xlu0 %v374
        %v376 = vpop.xlane.xlu0 %375
        %v377 = vadd.f32 %v280, %v281
        %378 = vadd.xlane.f32.xlu0 %v377
        %v379 = vpop.xlane.xlu0 %378
        %v380 = vadd.f32 %v282, %v283
        %381 = vadd.xlane.f32.xlu0 %v380
        %v382 = vpop.xlane.xlu0 %381
        %v383 = vadd.f32 %v284, %v285
        %384 = vadd.xlane.f32.xlu0 %v383
        %v385 = vpop.xlane.xlu0 %384
        %v386 = vadd.f32 %v286, %v287
        %387 = vadd.xlane.f32.xlu0 %v386
        %v388 = vpop.xlane.xlu0 %387
        %v389 = vadd.f32 %v288, %v289
        %390 = vadd.xlane.f32.xlu0 %v389
        %v391 = vpop.xlane.xlu0 %390
        %v392 = vadd.f32 %v290, %v291
        %393 = vadd.xlane.f32.xlu0 %v392
        %v394 = vpop.xlane.xlu0 %393
        %v395 = vadd.f32 %v292, %v293
        %396 = vadd.xlane.f32.xlu0 %v395
        %v397 = vpop.xlane.xlu0 %396
        %v398 = vadd.f32 %v294, %v295
        %399 = vadd.xlane.f32.xlu0 %v398
        %v400 = vpop.xlane.xlu0 %399
        %v401 = vadd.f32 %v296, %v297
        %402 = vadd.xlane.f32.xlu0 %v401
        %v403 = vpop.xlane.xlu0 %402
        %v404 = vadd.f32 %v298, %v299
        %405 = vadd.xlane.f32.xlu0 %v404
        %v406 = vpop.xlane.xlu0 %405
        %v407 = vadd.f32 %v300, %v301
        %408 = vadd.xlane.f32.xlu0 %v407
        %v409 = vpop.xlane.xlu0 %408
        %v410 = vadd.f32 %v302, %v303
        %411 = vadd.xlane.f32.xlu0 %v410
        %v412 = vpop.xlane.xlu0 %411
        %v413 = vadd.f32 %v304, %v305
        %414 = vadd.xlane.f32.xlu0 %v413
        %v415 = vpop.xlane.xlu0 %414
        %v416 = vadd.f32 %v306, %v307
        %417 = vadd.xlane.f32.xlu0 %v416
        %v418 = vpop.xlane.xlu0 %417
        %v419 = vadd.f32 %v308, %v309
        %420 = vadd.xlane.f32.xlu0 %v419
        %v421 = vpop.xlane.xlu0 %420
        %v422 = vadd.f32 %v310, %v311
        %423 = vadd.xlane.f32.xlu0 %v422
        %v424 = vpop.xlane.xlu0 %423
        %v425 = vadd.f32 %v312, %v313
        %426 = vadd.xlane.f32.xlu0 %v425
        %v427 = vpop.xlane.xlu0 %426
        %v428 = vadd.f32 %v314, %v315
        %429 = vadd.xlane.f32.xlu0 %v428
        %v430 = vpop.xlane.xlu0 %429
        %v431 = vadd.f32 %v316, %v317
        %432 = vadd.xlane.f32.xlu0 %v431
        %v433 = vpop.xlane.xlu0 %432
        %v434 = vadd.f32 %v318, %v319
        %435 = vadd.xlane.f32.xlu0 %v434
        %v436 = vpop.xlane.xlu0 %435
        %v437 = vadd.f32 %v320, %v321
        %438 = vadd.xlane.f32.xlu0 %v437
        %v439 = vpop.xlane.xlu0 %438
        %v440 = vadd.f32 %v322, %v323
        %441 = vadd.xlane.f32.xlu0 %v440
        %v442 = vpop.xlane.xlu0 %441
        %v443 = vadd.f32 %v324, %v325
        %444 = vadd.xlane.f32.xlu0 %v443
        %v445 = vpop.xlane.xlu0 %444
        %v446 = vld [vmem:[#allocation5] sm:$0xff]
        %v447 = vld [vmem:[#allocation5 + $0x8] sm:$0xff]
        %v448 = vld [vmem:[#allocation5 + $0x10] sm:$0xff]
        %v449 = vld [vmem:[#allocation5 + $0x18] sm:$0xff]
        %v450 = vld [vmem:[#allocation5 + $0x20] sm:$0xff]
        %v451 = vld [vmem:[#allocation5 + $0x28] sm:$0xff]
        %v452 = vld [vmem:[#allocation5 + $0x30] sm:$0xff]
        %v453 = vld [vmem:[#allocation5 + $0x38] sm:$0xff]
        %v454 = vld [vmem:[#allocation5 + $0x40] sm:$0xff]
        %v455 = vld [vmem:[#allocation5 + $0x48] sm:$0xff]
        %v456 = vld [vmem:[#allocation5 + $0x50] sm:$0xff]
        %v457 = vld [vmem:[#allocation5 + $0x58] sm:$0xff]
        %v458 = vld [vmem:[#allocation5 + $0x60] sm:$0xff]
        %v459 = vld [vmem:[#allocation5 + $0x68] sm:$0xff]
        %v460 = vld [vmem:[#allocation5 + $0x70] sm:$0xff]
        %v461 = vld [vmem:[#allocation5 + $0x78] sm:$0xff]
        %v462 = vld [vmem:[#allocation5 + $0x80] sm:$0xff]
        %v463 = vld [vmem:[#allocation5 + $0x88] sm:$0xff]
        %v464 = vld [vmem:[#allocation5 + $0x90] sm:$0xff]
        %v465 = vld [vmem:[#allocation5 + $0x98] sm:$0xff]
        %v466 = vld [vmem:[#allocation5 + $0xa0] sm:$0xff]
        %v467 = vld [vmem:[#allocation5 + $0xa8] sm:$0xff]
        %v468 = vld [vmem:[#allocation5 + $0xb0] sm:$0xff]
        %v469 = vld [vmem:[#allocation5 + $0xb8] sm:$0xff]
        %v470 = vld [vmem:[#allocation5 + $0xc0] sm:$0xff]
        %v471 = vld [vmem:[#allocation5 + $0xc8] sm:$0xff]
        %v472 = vld [vmem:[#allocation5 + $0xd0] sm:$0xff]
        %v473 = vld [vmem:[#allocation5 + $0xd8] sm:$0xff]
        %v474 = vld [vmem:[#allocation5 + $0xe0] sm:$0xff]
        %v475 = vld [vmem:[#allocation5 + $0xe8] sm:$0xff]
        %v476 = vld [vmem:[#allocation5 + $0xf0] sm:$0xff]
        %v477 = vld [vmem:[#allocation5 + $0xf8] sm:$0xff]
        %v478 = vld [vmem:[#allocation5 + $0x100] sm:$0xff]
        %v479 = vld [vmem:[#allocation5 + $0x108] sm:$0xff]
        %v480 = vld [vmem:[#allocation5 + $0x110] sm:$0xff]
        %v481 = vld [vmem:[#allocation5 + $0x118] sm:$0xff]
        %v482 = vld [vmem:[#allocation5 + $0x120] sm:$0xff]
        %v483 = vld [vmem:[#allocation5 + $0x128] sm:$0xff]
        %v484 = vld [vmem:[#allocation5 + $0x130] sm:$0xff]
        %v485 = vld [vmem:[#allocation5 + $0x138] sm:$0xff]
        %v486 = vld [vmem:[#allocation5 + $0x140] sm:$0xff]
        %v487 = vld [vmem:[#allocation5 + $0x148] sm:$0xff]
        %v488 = vld [vmem:[#allocation5 + $0x150] sm:$0xff]
        %v489 = vld [vmem:[#allocation5 + $0x158] sm:$0xff]
        %v490 = vld [vmem:[#allocation5 + $0x160] sm:$0xff]
        %v491 = vld [vmem:[#allocation5 + $0x168] sm:$0xff]
        %v492 = vld [vmem:[#allocation5 + $0x170] sm:$0xff]
        %v493 = vld [vmem:[#allocation5 + $0x178] sm:$0xff]
        %v494 = vld [vmem:[#allocation5 + $0x180] sm:$0xff]
        %v495 = vld [vmem:[#allocation5 + $0x188] sm:$0xff]
        %v536 = vlaneseq
        %v537 = vand.u32 %v536, 127
        %v538 = vlaneseq
        %v539 = vshrl.u32 %v538, 7
        %v540 = vsub.s32 %v537, %v539
        %v541 = vrot.slane %v328, %v540
        %v542 = vadd.s32 %v537, 4294967288
        %v543 = vlaneseq
        %v544 = vshrl.u32 %v543, 7
        %v545 = vsub.s32 %v542, %v544
        %v546 = vrot.slane %v331, %v545
        %vm547 = vcmask 130112
        %v548 = vsel %vm547, %v546, %v541
        %v549 = vadd.s32 %v537, 4294967280
        %v550 = vlaneseq
        %v551 = vshrl.u32 %v550, 7
        %v552 = vsub.s32 %v549, %v551
        %v553 = vrot.slane %v334, %v552
        %vm554 = vcmask 195712
        %v555 = vsel %vm554, %v553, %v548
        %v556 = vadd.s32 %v537, 4294967272
        %v557 = vlaneseq
        %v558 = vshrl.u32 %v557, 7
        %v559 = vsub.s32 %v556, %v558
        %v560 = vrot.slane %v337, %v559
        %vm561 = vcmask 261312
        %v562 = vsel %vm561, %v560, %v555
        %v563 = vadd.s32 %v537, 4294967264
        %v564 = vlaneseq
        %v565 = vshrl.u32 %v564, 7
        %v566 = vsub.s32 %v563, %v565
        %v567 = vrot.slane %v340, %v566
        %vm568 = vcmask 326912
        %v569 = vsel %vm568, %v567, %v562
        %v570 = vlaneseq
        %v571 = vshrl.u32 %v570, 7
        %v572 = vsub.s32 %v537, %v571
        %v573 = vrot.slane %v343, %v572
        %v574 = vlaneseq
        %v575 = vshrl.u32 %v574, 7
        %v576 = vsub.s32 %v542, %v575
        %v577 = vrot.slane %v346, %v576
        %v578 = vsel %vm547, %v577, %v573
        %v579 = vlaneseq
        %v580 = vshrl.u32 %v579, 7
        %v581 = vsub.s32 %v549, %v580
        %v582 = vrot.slane %v349, %v581
        %v583 = vsel %vm554, %v582, %v578
        %v584 = vlaneseq
        %v585 = vshrl.u32 %v584, 7
        %v586 = vsub.s32 %v556, %v585
        %v587 = vrot.slane %v352, %v586
        %v588 = vsel %vm561, %v587, %v583
        %v589 = vlaneseq
        %v590 = vshrl.u32 %v589, 7
        %v591 = vsub.s32 %v563, %v590
        %v592 = vrot.slane %v355, %v591
        %v593 = vsel %vm568, %v592, %v588
        %v594 = vlaneseq
        %v595 = vshrl.u32 %v594, 7
        %v596 = vsub.s32 %v537, %v595
        %v597 = vrot.slane %v358, %v596
        %v598 = vlaneseq
        %v599 = vshrl.u32 %v598, 7
        %v600 = vsub.s32 %v542, %v599
        %v601 = vrot.slane %v361, %v600
        %v602 = vsel %vm547, %v601, %v597
        %v603 = vlaneseq
        %v604 = vshrl.u32 %v603, 7
        %v605 = vsub.s32 %v549, %v604
        %v606 = vrot.slane %v364, %v605
        %v607 = vsel %vm554, %v606, %v602
        %v608 = vlaneseq
        %v609 = vshrl.u32 %v608, 7
        %v610 = vsub.s32 %v556, %v609
        %v611 = vrot.slane %v367, %v610
        %v612 = vsel %vm561, %v611, %v607
        %v613 = vlaneseq
        %v614 = vshrl.u32 %v613, 7
        %v615 = vsub.s32 %v563, %v614
        %v616 = vrot.slane %v370, %v615
        %v617 = vsel %vm568, %v616, %v612
        %v618 = vlaneseq
        %v619 = vshrl.u32 %v618, 7
        %v620 = vsub.s32 %v537, %v619
        %v621 = vrot.slane %v373, %v620
        %v622 = vlaneseq
        %v623 = vshrl.u32 %v622, 7
        %v624 = vsub.s32 %v542, %v623
        %v625 = vrot.slane %v376, %v624
        %v626 = vsel %vm547, %v625, %v621
        %v627 = vlaneseq
        %v628 = vshrl.u32 %v627, 7
        %v629 = vsub.s32 %v549, %v628
        %v630 = vrot.slane %v379, %v629
        %v631 = vsel %vm554, %v630, %v626
        %v632 = vlaneseq
        %v633 = vshrl.u32 %v632, 7
        %v634 = vsub.s32 %v556, %v633
        %v635 = vrot.slane %v382, %v634
        %v636 = vsel %vm561, %v635, %v631
        %v637 = vlaneseq
        %v638 = vshrl.u32 %v637, 7
        %v639 = vsub.s32 %v563, %v638
        %v640 = vrot.slane %v385, %v639
        %v641 = vsel %vm568, %v640, %v636
        %v642 = vlaneseq
        %v643 = vshrl.u32 %v642, 7
        %v644 = vsub.s32 %v537, %v643
        %v645 = vrot.slane %v388, %v644
        %v646 = vlaneseq
        %v647 = vshrl.u32 %v646, 7
        %v648 = vsub.s32 %v542, %v647
        %v649 = vrot.slane %v391, %v648
        %v650 = vsel %vm547, %v649, %v645
        %v651 = vlaneseq
        %v652 = vshrl.u32 %v651, 7
        %v653 = vsub.s32 %v549, %v652
        %v654 = vrot.slane %v394, %v653
        %v655 = vsel %vm554, %v654, %v650
        %v656 = vlaneseq
        %v657 = vshrl.u32 %v656, 7
        %v658 = vsub.s32 %v556, %v657
        %v659 = vrot.slane %v397, %v658
        %v660 = vsel %vm561, %v659, %v655
        %v661 = vlaneseq
        %v662 = vshrl.u32 %v661, 7
        %v663 = vsub.s32 %v563, %v662
        %v664 = vrot.slane %v400, %v663
        %v665 = vsel %vm568, %v664, %v660
        %v666 = vlaneseq
        %v667 = vshrl.u32 %v666, 7
        %v668 = vsub.s32 %v537, %v667
        %v669 = vrot.slane %v403, %v668
        %v670 = vlaneseq
        %v671 = vshrl.u32 %v670, 7
        %v672 = vsub.s32 %v542, %v671
        %v673 = vrot.slane %v406, %v672
        %v674 = vsel %vm547, %v673, %v669
        %v675 = vlaneseq
        %v676 = vshrl.u32 %v675, 7
        %v677 = vsub.s32 %v549, %v676
        %v678 = vrot.slane %v409, %v677
        %v679 = vsel %vm554, %v678, %v674
        %v680 = vlaneseq
        %v681 = vshrl.u32 %v680, 7
        %v682 = vsub.s32 %v556, %v681
        %v683 = vrot.slane %v412, %v682
        %v684 = vsel %vm561, %v683, %v679
        %v685 = vlaneseq
        %v686 = vshrl.u32 %v685, 7
        %v687 = vsub.s32 %v563, %v686
        %v688 = vrot.slane %v415, %v687
        %v689 = vsel %vm568, %v688, %v684
        %v690 = vlaneseq
        %v691 = vshrl.u32 %v690, 7
        %v692 = vsub.s32 %v537, %v691
        %v693 = vrot.slane %v418, %v692
        %v694 = vlaneseq
        %v695 = vshrl.u32 %v694, 7
        %v696 = vsub.s32 %v542, %v695
        %v697 = vrot.slane %v421, %v696
        %v698 = vsel %vm547, %v697, %v693
        %v699 = vlaneseq
        %v700 = vshrl.u32 %v699, 7
        %v701 = vsub.s32 %v549, %v700
        %v702 = vrot.slane %v424, %v701
        %v703 = vsel %vm554, %v702, %v698
        %v704 = vlaneseq
        %v705 = vshrl.u32 %v704, 7
        %v706 = vsub.s32 %v556, %v705
        %v707 = vrot.slane %v427, %v706
        %v708 = vsel %vm561, %v707, %v703
        %v709 = vlaneseq
        %v710 = vshrl.u32 %v709, 7
        %v711 = vsub.s32 %v563, %v710
        %v712 = vrot.slane %v430, %v711
        %v713 = vsel %vm568, %v712, %v708
        %v714 = vlaneseq
        %v715 = vshrl.u32 %v714, 7
        %v716 = vsub.s32 %v537, %v715
        %v717 = vrot.slane %v433, %v716
        %v718 = vlaneseq
        %v719 = vshrl.u32 %v718, 7
        %v720 = vsub.s32 %v542, %v719
        %v721 = vrot.slane %v436, %v720
        %v722 = vsel %vm547, %v721, %v717
        %v723 = vlaneseq
        %v724 = vshrl.u32 %v723, 7
        %v725 = vsub.s32 %v549, %v724
        %v726 = vrot.slane %v439, %v725
        %v727 = vsel %vm554, %v726, %v722
        %v728 = vlaneseq
        %v729 = vshrl.u32 %v728, 7
        %v730 = vsub.s32 %v556, %v729
        %v731 = vrot.slane %v442, %v730
        %v732 = vsel %vm561, %v731, %v727
        %v733 = vlaneseq
        %v734 = vshrl.u32 %v733, 7
        %v735 = vsub.s32 %v563, %v734
        %v736 = vrot.slane %v445, %v735
        %v737 = vsel %vm568, %v736, %v732
        %vm738 = vcmask 1041409
        %v739 = vsel %vm738, %v593, %v569
        %vm740 = vcmask 1042434
        %v741 = vsel %vm740, %v617, %v739
        %vm742 = vcmask 1043459
        %v743 = vsel %vm742, %v641, %v741
        %vm744 = vcmask 1044484
        %v745 = vsel %vm744, %v665, %v743
        %vm746 = vcmask 1045509
        %v747 = vsel %vm746, %v689, %v745
        %vm748 = vcmask 1046534
        %v749 = vsel %vm748, %v713, %v747
        %vm750 = vcmask 1047559
        %v751 = vsel %vm750, %v737, %v749
        %vm752 = vcmask 326656
        %v753 = vsel %vm752, %v751, 0
        %755 = vmatprep.subr.mxu0 0.0
        %756 = vmatpush1.msra.mxu0 0.0
        %757 = vmatprep.subr.mxu0 0.0
        %758 = vmatpush1.msra.mxu0 0.0
        %759 = vmatprep.subr.mxu0 0.0
        %760 = vmatpush1.msra.mxu0 0.0
        %761 = vmatprep.subr.mxu0 0.0
        %762 = vmatpush1.msra.mxu0 0.0
        %763 = vmatprep.subr.mxu0 0.0
        %764 = vmatpush1.msra.mxu0 0.0
        %765 = vmatprep.subr.mxu0 0.0
        %766 = vmatpush1.msra.mxu0 0.0
        %767 = vmatprep.subr.mxu0 0.0
        %768 = vmatpush1.msra.mxu0 0.0
        %769 = vmatprep.subr.mxu0 0.0
        %770 = vmatpush1.msra.mxu0 0.0
        %771 = vmatprep.subr.mxu0 0.0
        %772 = vmatpush1.msra.mxu0 0.0
        %773 = vmatprep.subr.mxu0 0.0
        %774 = vmatpush1.msra.mxu0 0.0
        %775 = vmatprep.subr.mxu0 0.0
        %776 = vmatpush1.msra.mxu0 0.0
        %777 = vmatprep.subr.mxu0 %v487
        %778 = vmatpush1.msra.mxu0 %v486
        %779 = vmatprep.subr.mxu0 %v477
        %780 = vmatpush1.msra.mxu0 %v476
        %781 = vmatprep.subr.mxu0 %v467
        %782 = vmatpush1.msra.mxu0 %v466
        %783 = vmatprep.subr.mxu0 %v457
        %784 = vmatpush1.msra.mxu0 %v456
        %785 = vmatprep.subr.mxu0 %v447
        %786 = vmatpush1.msra.mxu0 %v446
        %787 = vmatprep.subr.mxu0 0.0
        %788 = vmatpush2.msra.mxu0 0.0
        %789 = vmatprep.subr.mxu0 0.0
        %790 = vmatpush2.msra.mxu0 0.0
        %791 = vmatprep.subr.mxu0 0.0
        %792 = vmatpush2.msra.mxu0 0.0
        %793 = vmatprep.subr.mxu0 0.0
        %794 = vmatpush2.msra.mxu0 0.0
        %795 = vmatprep.subr.mxu0 0.0
        %796 = vmatpush2.msra.mxu0 0.0
        %797 = vmatprep.subr.mxu0 0.0
        %798 = vmatpush2.msra.mxu0 0.0
        %799 = vmatprep.subr.mxu0 0.0
        %800 = vmatpush2.msra.mxu0 0.0
        %801 = vmatprep.subr.mxu0 0.0
        %802 = vmatpush2.msra.mxu0 0.0
        %803 = vmatprep.subr.mxu0 0.0
        %804 = vmatpush2.msra.mxu0 0.0
        %805 = vmatprep.subr.mxu0 0.0
        %806 = vmatpush2.msra.mxu0 0.0
        %807 = vmatprep.subr.mxu0 0.0
        %808 = vmatpush2.msra.mxu0 0.0
        %809 = vmatprep.subr.mxu0 0.0
        %810 = vmatpush2.msra.mxu0 0.0
        %811 = vmatprep.subr.mxu0 0.0
        %812 = vmatpush2.msra.mxu0 0.0
        %813 = vmatprep.subr.mxu0 0.0
        %814 = vmatpush2.msra.mxu0 0.0
        %815 = vmatprep.subr.mxu0 0.0
        %816 = vmatpush2.msra.mxu0 0.0
        %817 = vmatprep.subr.mxu0 0.0
        %818 = vmatpush2.msra.mxu0 0.0
        %819 = vmatprep.mubr.f32.mxu0 0.0
        %820 = vmatmul.mubr.f32.gmra.mxu0 %v753
        %v821 = vpop.f32.mrf.mxu0
        %v822 = vadd.f32 0.0, %v821
        %v823 = vpop.f32.mrf.mxu0
        %v824 = vadd.f32 0.0, %v823
        %825 = vdwg.mxu0
        %826 = vmatprep.subr.mxu0 0.0
        %827 = vmatpush1.msra.mxu0 0.0
        %828 = vmatprep.subr.mxu0 0.0
        %829 = vmatpush1.msra.mxu0 0.0
        %830 = vmatprep.subr.mxu0 0.0
        %831 = vmatpush1.msra.mxu0 0.0
        %832 = vmatprep.subr.mxu0 0.0
        %833 = vmatpush1.msra.mxu0 0.0
        %834 = vmatprep.subr.mxu0 0.0
        %835 = vmatpush1.msra.mxu0 0.0
        %836 = vmatprep.subr.mxu0 0.0
        %837 = vmatpush1.msra.mxu0 0.0
        %838 = vmatprep.subr.mxu0 0.0
        %839 = vmatpush1.msra.mxu0 0.0
        %840 = vmatprep.subr.mxu0 0.0
        %841 = vmatpush1.msra.mxu0 0.0
        %842 = vmatprep.subr.mxu0 0.0
        %843 = vmatpush1.msra.mxu0 0.0
        %844 = vmatprep.subr.mxu0 0.0
        %845 = vmatpush1.msra.mxu0 0.0
        %846 = vmatprep.subr.mxu0 0.0
        %847 = vmatpush1.msra.mxu0 0.0
        %848 = vmatprep.subr.mxu0 %v489
        %849 = vmatpush1.msra.mxu0 %v488
        %850 = vmatprep.subr.mxu0 %v479
        %851 = vmatpush1.msra.mxu0 %v478
        %852 = vmatprep.subr.mxu0 %v469
        %853 = vmatpush1.msra.mxu0 %v468
        %854 = vmatprep.subr.mxu0 %v459
        %855 = vmatpush1.msra.mxu0 %v458
        %856 = vmatprep.subr.mxu0 %v449
        %857 = vmatpush1.msra.mxu0 %v448
        %858 = vmatprep.subr.mxu0 0.0
        %859 = vmatpush2.msra.mxu0 0.0
        %860 = vmatprep.subr.mxu0 0.0
        %861 = vmatpush2.msra.mxu0 0.0
        %862 = vmatprep.subr.mxu0 0.0
        %863 = vmatpush2.msra.mxu0 0.0
        %864 = vmatprep.subr.mxu0 0.0
        %865 = vmatpush2.msra.mxu0 0.0
        %866 = vmatprep.subr.mxu0 0.0
        %867 = vmatpush2.msra.mxu0 0.0
        %868 = vmatprep.subr.mxu0 0.0
        %869 = vmatpush2.msra.mxu0 0.0
        %870 = vmatprep.subr.mxu0 0.0
        %871 = vmatpush2.msra.mxu0 0.0
        %872 = vmatprep.subr.mxu0 0.0
        %873 = vmatpush2.msra.mxu0 0.0
        %874 = vmatprep.subr.mxu0 0.0
        %875 = vmatpush2.msra.mxu0 0.0
        %876 = vmatprep.subr.mxu0 0.0
        %877 = vmatpush2.msra.mxu0 0.0
        %878 = vmatprep.subr.mxu0 0.0
        %879 = vmatpush2.msra.mxu0 0.0
        %880 = vmatprep.subr.mxu0 0.0
        %881 = vmatpush2.msra.mxu0 0.0
        %882 = vmatprep.subr.mxu0 0.0
        %883 = vmatpush2.msra.mxu0 0.0
        %884 = vmatprep.subr.mxu0 0.0
        %885 = vmatpush2.msra.mxu0 0.0
        %886 = vmatprep.subr.mxu0 0.0
        %887 = vmatpush2.msra.mxu0 0.0
        %888 = vmatprep.subr.mxu0 0.0
        %889 = vmatpush2.msra.mxu0 0.0
        %890 = vmatprep.mubr.f32.mxu0 0.0
        %891 = vmatmul.mubr.f32.gmra.mxu0 %v753
        %v892 = vpop.f32.mrf.mxu0
        %v893 = vadd.f32 0.0, %v892
        %v894 = vpop.f32.mrf.mxu0
        %v895 = vadd.f32 0.0, %v894
        %896 = vdwg.mxu0
        %897 = vmatprep.subr.mxu0 0.0
        %898 = vmatpush1.msra.mxu0 0.0
        %899 = vmatprep.subr.mxu0 0.0
        %900 = vmatpush1.msra.mxu0 0.0
        %901 = vmatprep.subr.mxu0 0.0
        %902 = vmatpush1.msra.mxu0 0.0
        %903 = vmatprep.subr.mxu0 0.0
        %904 = vmatpush1.msra.mxu0 0.0
        %905 = vmatprep.subr.mxu0 0.0
        %906 = vmatpush1.msra.mxu0 0.0
        %907 = vmatprep.subr.mxu0 0.0
        %908 = vmatpush1.msra.mxu0 0.0
        %909 = vmatprep.subr.mxu0 0.0
        %910 = vmatpush1.msra.mxu0 0.0
        %911 = vmatprep.subr.mxu0 0.0
        %912 = vmatpush1.msra.mxu0 0.0
        %913 = vmatprep.subr.mxu0 0.0
        %914 = vmatpush1.msra.mxu0 0.0
        %915 = vmatprep.subr.mxu0 0.0
        %916 = vmatpush1.msra.mxu0 0.0
        %917 = vmatprep.subr.mxu0 0.0
        %918 = vmatpush1.msra.mxu0 0.0
        %919 = vmatprep.subr.mxu0 %v491
        %920 = vmatpush1.msra.mxu0 %v490
        %921 = vmatprep.subr.mxu0 %v481
        %922 = vmatpush1.msra.mxu0 %v480
        %923 = vmatprep.subr.mxu0 %v471
        %924 = vmatpush1.msra.mxu0 %v470
        %925 = vmatprep.subr.mxu0 %v461
        %926 = vmatpush1.msra.mxu0 %v460
        %927 = vmatprep.subr.mxu0 %v451
        %928 = vmatpush1.msra.mxu0 %v450
        %929 = vmatprep.subr.mxu0 0.0
        %930 = vmatpush2.msra.mxu0 0.0
        %931 = vmatprep.subr.mxu0 0.0
        %932 = vmatpush2.msra.mxu0 0.0
        %933 = vmatprep.subr.mxu0 0.0
        %934 = vmatpush2.msra.mxu0 0.0
        %935 = vmatprep.subr.mxu0 0.0
        %936 = vmatpush2.msra.mxu0 0.0
        %937 = vmatprep.subr.mxu0 0.0
        %938 = vmatpush2.msra.mxu0 0.0
        %939 = vmatprep.subr.mxu0 0.0
        %940 = vmatpush2.msra.mxu0 0.0
        %941 = vmatprep.subr.mxu0 0.0
        %942 = vmatpush2.msra.mxu0 0.0
        %943 = vmatprep.subr.mxu0 0.0
        %944 = vmatpush2.msra.mxu0 0.0
        %945 = vmatprep.subr.mxu0 0.0
        %946 = vmatpush2.msra.mxu0 0.0
        %947 = vmatprep.subr.mxu0 0.0
        %948 = vmatpush2.msra.mxu0 0.0
        %949 = vmatprep.subr.mxu0 0.0
        %950 = vmatpush2.msra.mxu0 0.0
        %951 = vmatprep.subr.mxu0 0.0
        %952 = vmatpush2.msra.mxu0 0.0
        %953 = vmatprep.subr.mxu0 0.0
        %954 = vmatpush2.msra.mxu0 0.0
        %955 = vmatprep.subr.mxu0 0.0
        %956 = vmatpush2.msra.mxu0 0.0
        %957 = vmatprep.subr.mxu0 0.0
        %958 = vmatpush2.msra.mxu0 0.0
        %959 = vmatprep.subr.mxu0 0.0
        %960 = vmatpush2.msra.mxu0 0.0
        %961 = vmatprep.mubr.f32.mxu0 0.0
        %962 = vmatmul.mubr.f32.gmra.mxu0 %v753
        %v963 = vpop.f32.mrf.mxu0
        %v964 = vadd.f32 0.0, %v963
        %v965 = vpop.f32.mrf.mxu0
        %v966 = vadd.f32 0.0, %v965
        %967 = vdwg.mxu0
        %968 = vmatprep.subr.mxu0 0.0
        %969 = vmatpush1.msra.mxu0 0.0
        %970 = vmatprep.subr.mxu0 0.0
        %971 = vmatpush1.msra.mxu0 0.0
        %972 = vmatprep.subr.mxu0 0.0
        %973 = vmatpush1.msra.mxu0 0.0
        %974 = vmatprep.subr.mxu0 0.0
        %975 = vmatpush1.msra.mxu0 0.0
        %976 = vmatprep.subr.mxu0 0.0
        %977 = vmatpush1.msra.mxu0 0.0
        %978 = vmatprep.subr.mxu0 0.0
        %979 = vmatpush1.msra.mxu0 0.0
        %980 = vmatprep.subr.mxu0 0.0
        %981 = vmatpush1.msra.mxu0 0.0
        %982 = vmatprep.subr.mxu0 0.0
        %983 = vmatpush1.msra.mxu0 0.0
        %984 = vmatprep.subr.mxu0 0.0
        %985 = vmatpush1.msra.mxu0 0.0
        %986 = vmatprep.subr.mxu0 0.0
        %987 = vmatpush1.msra.mxu0 0.0
        %988 = vmatprep.subr.mxu0 0.0
        %989 = vmatpush1.msra.mxu0 0.0
        %990 = vmatprep.subr.mxu0 %v493
        %991 = vmatpush1.msra.mxu0 %v492
        %992 = vmatprep.subr.mxu0 %v483
        %993 = vmatpush1.msra.mxu0 %v482
        %994 = vmatprep.subr.mxu0 %v473
        %995 = vmatpush1.msra.mxu0 %v472
        %996 = vmatprep.subr.mxu0 %v463
        %997 = vmatpush1.msra.mxu0 %v462
        %998 = vmatprep.subr.mxu0 %v453
        %999 = vmatpush1.msra.mxu0 %v452
        %1000 = vmatprep.subr.mxu0 0.0
        %1001 = vmatpush2.msra.mxu0 0.0
        %1002 = vmatprep.subr.mxu0 0.0
        %1003 = vmatpush2.msra.mxu0 0.0
        %1004 = vmatprep.subr.mxu0 0.0
        %1005 = vmatpush2.msra.mxu0 0.0
        %1006 = vmatprep.subr.mxu0 0.0
        %1007 = vmatpush2.msra.mxu0 0.0
        %1008 = vmatprep.subr.mxu0 0.0
        %1009 = vmatpush2.msra.mxu0 0.0
        %1010 = vmatprep.subr.mxu0 0.0
        %1011 = vmatpush2.msra.mxu0 0.0
        %1012 = vmatprep.subr.mxu0 0.0
        %1013 = vmatpush2.msra.mxu0 0.0
        %1014 = vmatprep.subr.mxu0 0.0
        %1015 = vmatpush2.msra.mxu0 0.0
        %1016 = vmatprep.subr.mxu0 0.0
        %1017 = vmatpush2.msra.mxu0 0.0
        %1018 = vmatprep.subr.mxu0 0.0
        %1019 = vmatpush2.msra.mxu0 0.0
        %1020 = vmatprep.subr.mxu0 0.0
        %1021 = vmatpush2.msra.mxu0 0.0
        %1022 = vmatprep.subr.mxu0 0.0
        %1023 = vmatpush2.msra.mxu0 0.0
        %1024 = vmatprep.subr.mxu0 0.0
        %1025 = vmatpush2.msra.mxu0 0.0
        %1026 = vmatprep.subr.mxu0 0.0
        %1027 = vmatpush2.msra.mxu0 0.0
        %1028 = vmatprep.subr.mxu0 0.0
        %1029 = vmatpush2.msra.mxu0 0.0
        %1030 = vmatprep.subr.mxu0 0.0
        %1031 = vmatpush2.msra.mxu0 0.0
        %1032 = vmatprep.mubr.f32.mxu0 0.0
        %1033 = vmatmul.mubr.f32.gmra.mxu0 %v753
        %v1034 = vpop.f32.mrf.mxu0
        %v1035 = vadd.f32 0.0, %v1034
        %v1036 = vpop.f32.mrf.mxu0
        %v1037 = vadd.f32 0.0, %v1036
        %1038 = vdwg.mxu0
        %1039 = vmatprep.subr.mxu0 0.0
        %1040 = vmatpush1.msra.mxu0 0.0
        %1041 = vmatprep.subr.mxu0 0.0
        %1042 = vmatpush1.msra.mxu0 0.0
        %1043 = vmatprep.subr.mxu0 0.0
        %1044 = vmatpush1.msra.mxu0 0.0
        %1045 = vmatprep.subr.mxu0 0.0
        %1046 = vmatpush1.msra.mxu0 0.0
        %1047 = vmatprep.subr.mxu0 0.0
        %1048 = vmatpush1.msra.mxu0 0.0
        %1049 = vmatprep.subr.mxu0 0.0
        %1050 = vmatpush1.msra.mxu0 0.0
        %1051 = vmatprep.subr.mxu0 0.0
        %1052 = vmatpush1.msra.mxu0 0.0
        %1053 = vmatprep.subr.mxu0 0.0
        %1054 = vmatpush1.msra.mxu0 0.0
        %1055 = vmatprep.subr.mxu0 0.0
        %1056 = vmatpush1.msra.mxu0 0.0
        %1057 = vmatprep.subr.mxu0 0.0
        %1058 = vmatpush1.msra.mxu0 0.0
        %1059 = vmatprep.subr.mxu0 0.0
        %1060 = vmatpush1.msra.mxu0 0.0
        %1061 = vmatprep.subr.mxu0 %v495
        %1062 = vmatpush1.msra.mxu0 %v494
        %1063 = vmatprep.subr.mxu0 %v485
        %1064 = vmatpush1.msra.mxu0 %v484
        %1065 = vmatprep.subr.mxu0 %v475
        %1066 = vmatpush1.msra.mxu0 %v474
        %1067 = vmatprep.subr.mxu0 %v465
        %1068 = vmatpush1.msra.mxu0 %v464
        %1069 = vmatprep.subr.mxu0 %v455
        %1070 = vmatpush1.msra.mxu0 %v454
        %1071 = vmatprep.subr.mxu0 0.0
        %1072 = vmatpush2.msra.mxu0 0.0
        %1073 = vmatprep.subr.mxu0 0.0
        %1074 = vmatpush2.msra.mxu0 0.0
        %1075 = vmatprep.subr.mxu0 0.0
        %1076 = vmatpush2.msra.mxu0 0.0
        %1077 = vmatprep.subr.mxu0 0.0
        %1078 = vmatpush2.msra.mxu0 0.0
        %1079 = vmatprep.subr.mxu0 0.0
        %1080 = vmatpush2.msra.mxu0 0.0
        %1081 = vmatprep.subr.mxu0 0.0
        %1082 = vmatpush2.msra.mxu0 0.0
        %1083 = vmatprep.subr.mxu0 0.0
        %1084 = vmatpush2.msra.mxu0 0.0
        %1085 = vmatprep.subr.mxu0 0.0
        %1086 = vmatpush2.msra.mxu0 0.0
        %1087 = vmatprep.subr.mxu0 0.0
        %1088 = vmatpush2.msra.mxu0 0.0
        %1089 = vmatprep.subr.mxu0 0.0
        %1090 = vmatpush2.msra.mxu0 0.0
        %1091 = vmatprep.subr.mxu0 0.0
        %1092 = vmatpush2.msra.mxu0 0.0
        %1093 = vmatprep.subr.mxu0 0.0
        %1094 = vmatpush2.msra.mxu0 0.0
        %1095 = vmatprep.subr.mxu0 0.0
        %1096 = vmatpush2.msra.mxu0 0.0
        %1097 = vmatprep.subr.mxu0 0.0
        %1098 = vmatpush2.msra.mxu0 0.0
        %1099 = vmatprep.subr.mxu0 0.0
        %1100 = vmatpush2.msra.mxu0 0.0
        %1101 = vmatprep.subr.mxu0 0.0
        %1102 = vmatpush2.msra.mxu0 0.0
        %1103 = vmatprep.mubr.f32.mxu0 0.0
        %1104 = vmatmul.mubr.f32.gmra.mxu0 %v753
        %v1105 = vpop.f32.mrf.mxu0
        %v1106 = vadd.f32 0.0, %v1105
        %v1107 = vpop.f32.mrf.mxu0
        %v1108 = vadd.f32 0.0, %v1107
        %1109 = vdwg.mxu0
        %v1110 = vmax.f32 %v822, %v824
        %v1111 = vmax.f32 %v1110, %v893
        %v1112 = vmax.f32 %v1111, %v895
        %v1113 = vmax.f32 %v1112, %v964
        %v1114 = vmax.f32 %v1113, %v966
        %v1115 = vmax.f32 %v1114, %v1035
        %v1116 = vmax.f32 %v1115, %v1037
        %v1117 = vmax.f32 %v1116, %v1106
        %v1118 = vmax.f32 %v1117, %v1108
        %v1119 = vld [vmem:[%s2] sm:$0x1]
        %v1121 = vlaneseq
        %v1122 = vshrl.u32 %v1121, 7
        %v1123 = vsub.s32 0, %v1122
        %v1124 = vrot.slane %v1119, %v1123
        %v1126 = vadd.f32 %v1118, %v1124
        %1127 = vst [vmem:[%s204] sm:$0xff] %v1126
        %s1128 = sand.u32 %s97, 1
        %s1129 = scalar_lea.sflag [#allocation4], %s1128
        %s1130 = sand.u32 %s97, 1
        %s1131 = smul.addr %s1130, 8
        %s1132 = scalar_lea.vmem [#allocation7], %s1131
        // Predicated region
        $region41: #{tpu_custom_call.1} parent=31 // pred_check
          %p1133 = pneg %p107
        $region42: #{tpu_custom_call.1} parent=31 // pred_check_branch
          %1135 = sbr.rel (%p1133) target = $region44
        $region43: #{tpu_custom_call.1} parent=31 // pred_region
          %s1137 = ssub.s32 128, 128
          %1138 = vsyncadd %s1129, %s1137
          %s1139 = smul.addr %s21, 128
          %s1140 = scalar_lea.hbm %s3, %s1139
          %s1142 = sshll.u32 %s1132, 4
          %s1143 = int_to_ptr.vmem [resolvable:$true] %s1142
          %1145 = dma.vmem_to_hbm [thread:$0]  %s1143, 128, %s1140, %s1129
        $region44: #{tpu_custom_call.1} parent=31 // pred_fallthru
          _
      $region32: #{tpu_custom_call.1} parent=5 // pred_fallthru
        _
      %p1146 = scmp.le.s32.totalorder 2, %s16
      // Predicated region
      $region45: #{tpu_custom_call.1} parent=5 // pred_check
        %p1147 = pneg %p1146
      $region46: #{tpu_custom_call.1} parent=5 // pred_check_branch
        %1149 = sbr.rel (%p1147) target = $region48
      $region47: #{tpu_custom_call.1} parent=5 // pred_region
        %s1150 = ssub.s32 %s16, 2
        // Predicated region
        $region49: #{tpu_custom_call.1} parent=47 // pred_check
          %p1151 = pneg %p113
        $region50: #{tpu_custom_call.1} parent=47 // pred_check_branch
          %1153 = sbr.rel (%p1151) target = $region52
        $region51: #{tpu_custom_call.1} parent=47 // pred_region
          %s1154 = sand.u32 %s98, 1
          %s1155 = scalar_lea.sflag [#allocation4], %s1154
          %s1156 = sand.u32 %s98, 1
          %s1157 = smul.addr %s1156, 8
          %s1158 = scalar_lea.vmem [#allocation7], %s1157
          %1159 = dma.done %s1155, 128
        $region52: #{tpu_custom_call.1} parent=47 // pred_fallthru
          _
      $region48: #{tpu_custom_call.1} parent=5 // pred_fallthru
        _
    $region6: #{tpu_custom_call.1} parent=1 // loop_footer
      %s20 = sadd.s32 1, %s16
    $region7: #{tpu_custom_call.1} parent=1 // loop_footer_branch
      %15 = sbr.rel target = $region3
    $region8: #{tpu_custom_call.1} parent=1 // loop_exit
      _
    %1160 = vsyncpa [#allocation3], 1
    %s1161 = scalar_lea.sflag [#allocation3], 1
    %1162 = vsyncpa %s1161, 1
    %1163 = vsyncpa [#allocation6], 1
    %1164 = vsyncpa [#allocation4], 1
    %s1165 = scalar_lea.sflag [#allocation4], 1
    %1166 = vsyncpa %s1165, 1

</llo_original>
